<compile_context>
chip_gen: v7x
topology: tpu7x:2x2x1
jax: 0.10.0
libtpu: 0.0.40
codegen_flags: <defaults>
</compile_context>

<pallas_src>
import jax
import jax.numpy as jnp
from jax.experimental import pallas as pl
from jax.experimental.pallas import tpu as pltpu


def _prompt_assemble_kernel(ctx_ref, pre_ref, suf_ref, out_ref):
    """Assemble prompts = cat([prefix, ctx_shifted_b, suffix], dim=1) for one
    (class tile, batch row) grid point.  Pure layout copy.

    ctx_ref : (1, n_ctx, ctx_dim)        ctx + meta_net(im_features)[b], already out_dtype
    pre_ref : (TC, 1, ctx_dim)           token_prefix tile, already out_dtype
    suf_ref : (TC, n_suffix, ctx_dim)    token_suffix tile, already out_dtype
    out_ref : (1, TC, seq_len, ctx_dim)
    """
    tc = pre_ref.shape[0]
    n_ctx = ctx_ref.shape[1]
    ctx_dim = ctx_ref.shape[2]
    ctx_bcast = jnp.broadcast_to(ctx_ref[...], (tc, n_ctx, ctx_dim))
    # Single full-block store (no masked sublane-sliced stores).
    out_ref[...] = jnp.concatenate([pre_ref[...], ctx_bcast, suf_ref[...]], axis=1)[None]


def _vmem_budget_and_limit():
    """Generation-aware VMEM limit + tile budget (headroom for compiler scratch)."""
    try:
        cap = pltpu.get_tpu_info().vmem_capacity_bytes
    except Exception:
        cap = 64 << 20                        # conservative fallback (v7x per-TC VMEM)
    limit = int(min(cap // 2, 64 << 20))      # v5e/v6e: 64 MiB, v7x: 32 MiB
    budget = (limit * 3) // 4                 # leave headroom for internal scratch
    return budget, limit


def _pick_class_tile(n_cls, n_ctx, n_suffix, ctx_dim, out_dtype, vmem_budget_bytes):
    """Largest class tile whose double-buffered blocks + concat/broadcast temps fit."""
    seq_len = 1 + n_ctx + n_suffix
    eb = jnp.dtype(out_dtype).itemsize
    per_class = eb * ctx_dim * (
        2 * (1 + n_suffix + seq_len)          # prefix + suffix + output blocks, x2 buffers
        + seq_len + n_ctx)                    # concat temp + broadcast temp (single copy)
    fixed = 2 * n_ctx * ctx_dim * eb          # ctx_shifted block, x2 buffers
    tc = max(1, (vmem_budget_bytes - fixed) // max(per_class, 1))
    return int(min(n_cls, tc))


def prompt_learner_forward(im_features, w1, b1, w2, b2, ctx, prefix, suffix,
                           out_dtype=jnp.float32, class_tile=None):
    B, _ = im_features.shape
    n_ctx, ctx_dim = ctx.shape
    n_cls = prefix.shape[0]
    n_suffix = suffix.shape[1]
    seq_len = 1 + n_ctx + n_suffix

    # --- meta_net + ctx shift hoisted into XLA (tiny matmuls / adds) -------------
    f32 = jnp.float32
    h = jnp.maximum(im_features.astype(f32) @ w1.astype(f32) + b1.astype(f32), 0.0)
    bias = h @ w2.astype(f32) + b2.astype(f32)                           # (B, ctx_dim)
    ctx_shifted = (ctx.astype(f32)[None, :, :] + bias[:, None, :]).astype(out_dtype)

    # Cast the frozen CLIP embeddings once in XLA (halves reads on the bf16 path,
    # halves their VMEM footprint, removes per-element VPU casts in the kernel).
    prefix = prefix.astype(out_dtype)
    suffix = suffix.astype(out_dtype)

    budget, vmem_limit = _vmem_budget_and_limit()
    tc = class_tile if class_tile is not None else _pick_class_tile(
        n_cls, n_ctx, n_suffix, ctx_dim, out_dtype, budget)
    # Keep >= 2 class tiles when possible so v7x can shard the leading "parallel"
    # class axis across both TensorCores (costs at most one extra grid step).
    if n_cls >= 2 and pl.cdiv(n_cls, tc) < 2:
        tc = (n_cls + 1) // 2
    n_ct = pl.cdiv(n_cls, tc)

    # Batch is the INNERMOST grid axis: prefix/suffix block indices are constant
    # across the inner B loop, so their HBM reads happen once, not B times.
    grid = (n_ct, B)

    eb = jnp.dtype(out_dtype).itemsize
    bytes_out = B * n_cls * seq_len * ctx_dim * eb
    bytes_in = (n_cls * (1 + n_suffix) * ctx_dim * eb      # prefix + suffix read once
                + n_ct * B * n_ctx * ctx_dim * eb)         # ctx_shifted per (c, b)
    cost = pl.CostEstimate(flops=0, transcendentals=0,
                           bytes_accessed=bytes_out + bytes_in)

    return pl.pallas_call(
        _prompt_assemble_kernel,
        out_shape=jax.ShapeDtypeStruct((B, n_cls, seq_len, ctx_dim), out_dtype),
        grid_spec=pltpu.PrefetchScalarGridSpec(
            num_scalar_prefetch=0,
            grid=grid,
            in_specs=[
                pl.BlockSpec((1, n_ctx, ctx_dim), lambda c, b: (b, 0, 0)),          # ctx_shifted[b]
                pl.BlockSpec((tc, 1, ctx_dim), lambda c, b: (c, 0, 0)),             # token_prefix tile
                pl.BlockSpec((tc, n_suffix, ctx_dim), lambda c, b: (c, 0, 0)),      # token_suffix tile
            ],
            out_specs=pl.BlockSpec((1, tc, seq_len, ctx_dim),
                                   lambda c, b: (b, c, 0, 0)),
        ),
        compiler_params=pltpu.CompilerParams(
            dimension_semantics=("parallel", "arbitrary"),
            vmem_limit_bytes=vmem_limit,
        ),
        cost_estimate=cost,
    )(ctx_shifted, prefix, suffix)


def prompt_learner_reference(im_features, w1, b1, w2, b2, ctx, prefix, suffix):
    """Plain-JAX reference mirroring the PyTorch forward exactly."""
    h = jnp.maximum(im_features @ w1 + b1, 0.0)
    bias = (h @ w2 + b2)[:, None, :]                  # (B, 1, ctx_dim)
    ctx_shifted = ctx[None, :, :] + bias              # (B, n_ctx, ctx_dim)
    n_cls = prefix.shape[0]
    prompts = []
    for i in range(im_features.shape[0]):
        ctx_i = jnp.broadcast_to(ctx_shifted[i][None], (n_cls,) + ctx_shifted[i].shape)
        pts_i = jnp.concatenate([prefix, ctx_i, suffix], axis=1)
        prompts.append(pts_i)
    return jnp.stack(prompts)


if __name__ == "__main__":
    # Small synthetic configuration consistent with the module.
    B = 2            # batch of image features
    n_cls = 3        # number of class names (non-divisible by the forced 2-class tile)
    n_ctx = 4        # context tokens
    ctx_dim = 32     # transformer width (ln_final.weight.shape[0])
    vis_dim = 64     # visual output dim
    hidden = vis_dim // 16   # meta_net bottleneck
    n_suffix = 3     # suffix tokens -> seq_len = 1 + 4 + 3 = 8

    key = jax.random.PRNGKey(0)
    ks = jax.random.split(key, 8)

    # Deterministic synthetic parameters (shapes match PromptLearner.__init__).
    im_features = jax.random.normal(ks[0], (B, vis_dim), jnp.float32)
    w1 = jax.random.normal(ks[1], (vis_dim, hidden), jnp.float32) * 0.05
    b1 = jax.random.normal(ks[2], (1, hidden), jnp.float32) * 0.05
    w2 = jax.random.normal(ks[3], (hidden, ctx_dim), jnp.float32) * 0.05
    b2 = jax.random.normal(ks[4], (1, ctx_dim), jnp.float32) * 0.05
    ctx = jax.random.normal(ks[5], (n_ctx, ctx_dim), jnp.float32) * 0.02
    # Synthetic frozen CLIP token embeddings (token_prefix / token_suffix buffers).
    token_prefix = jax.random.normal(ks[6], (n_cls, 1, ctx_dim), jnp.float32) * 0.02
    token_suffix = jax.random.normal(ks[7], (n_cls, n_suffix, ctx_dim), jnp.float32) * 0.02

    ref = prompt_learner_reference(im_features, w1, b1, w2, b2, ctx,
                                   token_prefix, token_suffix)

    # f32 output path: exact match to the reference (also exercises a partial
    # boundary class tile, since the class axis is split into >= 2 tiles).
    out = prompt_learner_forward(im_features, w1, b1, w2, b2, ctx,
                                 token_prefix, token_suffix,
                                 out_dtype=jnp.float32)
    out = jax.block_until_ready(out)
    assert out.shape == (B, n_cls, 1 + n_ctx + n_suffix, ctx_dim)
    assert jnp.allclose(out, ref, atol=1e-5, rtol=1e-5), "f32 mismatch vs reference"

    # bf16 output path (halves the dominant HBM write traffic); looser tolerance.
    out_bf16 = prompt_learner_forward(im_features, w1, b1, w2, b2, ctx,
                                      token_prefix, token_suffix,
                                      out_dtype=jnp.bfloat16)
    out_bf16 = jax.block_until_ready(out_bf16)
    assert out_bf16.shape == (B, n_cls, 1 + n_ctx + n_suffix, ctx_dim)
    assert jnp.allclose(out_bf16.astype(jnp.float32), ref, atol=2e-2, rtol=2e-2), \
        "bf16 mismatch vs reference"

    print("KERNEL_OK")
</pallas_src>

<mosaic_0001>
module attributes {stable_mosaic.version = 11 : i64} {
  func.func @_prompt_assemble_kernel(%arg0: i32, %arg1: i32, %arg2: memref<1x4x32xf32, #tpu.memory_space<vmem>>, %arg3: memref<2x1x32xf32, #tpu.memory_space<vmem>>, %arg4: memref<2x3x32xf32, #tpu.memory_space<vmem>>, %arg5: memref<1x2x8x32xf32, #tpu.memory_space<vmem>>) attributes {dimension_semantics = [#tpu.dimension_semantics<parallel>, #tpu.dimension_semantics<arbitrary>], iteration_bounds = array<i64: 2, 2>, scalar_prefetch = 0 : i64, scratch_operands = 0 : i64, tpu.core_type = #tpu.core_type<tc>, window_params = [{transform_indices = @transform_0, window_bounds = array<i64: 1, 4, 32>}, {transform_indices = @transform_1, window_bounds = array<i64: 2, 1, 32>}, {transform_indices = @transform_2, window_bounds = array<i64: 2, 3, 32>}, {transform_indices = @transform_3, window_bounds = array<i64: 1, 2, 8, 32>}]} {
    %c0 = arith.constant 0 : index
    %c0_0 = arith.constant 0 : index
    %c0_1 = arith.constant 0 : index
    %0 = vector.load %arg2[%c0, %c0_0, %c0_1] : memref<1x4x32xf32, #tpu.memory_space<vmem>>, vector<1x4x32xf32>
    %1 = vector.shape_cast %0 : vector<1x4x32xf32> to vector<1x4x32xf32>
    %2 = vector.broadcast %1 : vector<1x4x32xf32> to vector<2x4x32xf32>
    %c0_2 = arith.constant 0 : index
    %c0_3 = arith.constant 0 : index
    %c0_4 = arith.constant 0 : index
    %3 = vector.load %arg3[%c0_2, %c0_3, %c0_4] : memref<2x1x32xf32, #tpu.memory_space<vmem>>, vector<2x1x32xf32>
    %c0_5 = arith.constant 0 : index
    %c0_6 = arith.constant 0 : index
    %c0_7 = arith.constant 0 : index
    %4 = vector.load %arg4[%c0_5, %c0_6, %c0_7] : memref<2x3x32xf32, #tpu.memory_space<vmem>>, vector<2x3x32xf32>
    %5 = tpu.concatenate %3, %2, %4 in 1 : vector<2x1x32xf32>, vector<2x4x32xf32>, vector<2x3x32xf32> -> vector<2x8x32xf32>
    %6 = vector.shape_cast %5 : vector<2x8x32xf32> to vector<1x2x8x32xf32>
    %c0_8 = arith.constant 0 : index
    %c0_9 = arith.constant 0 : index
    %c0_10 = arith.constant 0 : index
    %c0_11 = arith.constant 0 : index
    %7 = vector.load %arg5[%c0_8, %c0_9, %c0_10, %c0_11] : memref<1x2x8x32xf32, #tpu.memory_space<vmem>>, vector<1x2x8x32xf32>
    tpu.vector_store %arg5[%c0_8, %c0_9, %c0_10, %c0_11], %6 {strides = array<i32>} : memref<1x2x8x32xf32, #tpu.memory_space<vmem>>, vector<1x2x8x32xf32>,
    return
  }
  func.func @transform_0(%arg0: i32, %arg1: i32) -> (i32, i32, i32) {
    %c0_i32 = arith.constant 0 : i32
    %c0_i32_0 = arith.constant 0 : i32
    %c0_i32_1 = arith.constant 0 : i32
    return %arg1, %c0_i32, %c0_i32_0 : i32, i32, i32
  }
  func.func @transform_1(%arg0: i32, %arg1: i32) -> (i32, i32, i32) {
    %c0_i32 = arith.constant 0 : i32
    %c0_i32_0 = arith.constant 0 : i32
    %c0_i32_1 = arith.constant 0 : i32
    return %arg0, %c0_i32, %c0_i32_0 : i32, i32, i32
  }
  func.func @transform_2(%arg0: i32, %arg1: i32) -> (i32, i32, i32) {
    %c0_i32 = arith.constant 0 : i32
    %c0_i32_0 = arith.constant 0 : i32
    %c0_i32_1 = arith.constant 0 : i32
    return %arg0, %c0_i32, %c0_i32_0 : i32, i32, i32
  }
  func.func @transform_3(%arg0: i32, %arg1: i32) -> (i32, i32, i32, i32) {
    %c0_i32 = arith.constant 0 : i32
    %c0_i32_0 = arith.constant 0 : i32
    %c0_i32_1 = arith.constant 0 : i32
    return %arg1, %arg0, %c0_i32, %c0_i32_0 : i32, i32, i32, i32
  }
}

</mosaic_0001>

<llo_original>
// kernel: tpu_custom_call.1
$region0: #{tpu_custom_call.1}
  #allocation0 [shape = 'u32[]', space=smem, size = 0x4, offset = 0x4, fixed_abs, tag = 'smem constant byte address 0x4 - core index']
  #allocation1 [shape = 'u32[144,128]{1,0:T(1,128)}', space=vmem, size = 0x12000, scoped, tag = 'internal scratch']
  %s0 = inlined_call_operand.hbm [shape: f32[2,4,32], index: 0, kind: input, shape index: {}]
  %s1 = inlined_call_operand.vmem [shape: f32[3,1,32], index: 1, kind: input, shape index: {}]
  %s2 = inlined_call_operand.hbm [shape: f32[3,3,32], index: 2, kind: input, shape index: {}]
  %s3 = inlined_call_operand.hbm [shape: f32[2,3,8,32], index: 3, kind: output, shape index: {}]
  %s4 = sld [smem:[#allocation0]]
  $region53: #{tpu_custom_call.1} parent=0
    _
  %s6 = ssub.s32 1, %s4
  %s7 = scalar_select 0, %s6, %s4
  $region1: #{tpu_custom_call.1} parent=0
    #allocation2 [shape = 'u8[4096]{0}', space=vmem, size = 0x1000, scoped, tag = 'input window, operand 0']
    #allocation3 [shape = 's32[2]{0}', space=sflag, size = 0x8, scoped, tag = 'scoped memory for tpu_custom_call.1']
    #allocation4 [shape = 's32[2]{0}', space=sflag, size = 0x8, scoped, tag = 'scoped memory for tpu_custom_call.1']
    #allocation5 [shape = 'u8[8192]{0}', space=vmem, size = 0x2000, scoped, tag = 'input window, operand 2']
    #allocation6 [shape = 's32[2]{0}', space=sflag, size = 0x8, scoped, tag = 'scoped memory for tpu_custom_call.1']
    #allocation7 [shape = 'u8[16384]{0}', space=vmem, size = 0x4000, scoped, tag = 'output window, operand 0']
    %8 = vsyncpa [#allocation3], 0
    %s9 = scalar_lea.sflag [#allocation3], 1
    %10 = vsyncpa %s9, 0
    %11 = vsyncpa [#allocation6], 0
    %s12 = scalar_lea.sflag [#allocation6], 1
    %13 = vsyncpa %s12, 0
    %14 = vsyncpa [#allocation4], 0
    %s15 = scalar_lea.sflag [#allocation4], 1
    %16 = vsyncpa %s15, 0
    loop: start=0, step=1, limit=6
    $region2: #{tpu_custom_call.1} parent=1 // loop_pre_header
      _
    $region3: #{tpu_custom_call.1} parent=1 // loop_header
      %s18 = sphi 0, %s22
      %p19 = scmp.ge.s32.totalorder %s18, 6
      %s25 = sphi 0, %s37
      %s26 = sphi 0, %s33
      %s27 = sphi 0, %s25
      %s28 = sphi 0, %s26
      %s29 = sphi 0, %s27
      %s30 = sphi 0, %s28
      %s40 = sphi 0, %s42
      %s43 = sphi 0, %s40
      %s44 = sphi 0, %s43
      %s60 = sphi 0, %s44
      %s66 = sphi 0, %s68
      %s69 = sphi 0, %s66
      %s70 = sphi 0, %s69
      %s86 = sphi 0, %s70
      %s92 = sphi 0, %s94
      %s95 = sphi 0, %s92
      %s96 = sphi 0, %s95
      %s112 = sphi 0, %s96
      %s120 = sphi 0, %s122
      %s123 = sphi 0, %s120
      %s124 = sphi 0, %s123
      %s140 = sphi 0, %s124
    $region4: #{tpu_custom_call.1} parent=1 // loop_header_branch
      %21 = sbr.rel (%p19) target = $region8
    $region5: #{tpu_custom_call.1} parent=1 // loop_body
      %s23 = ssub.s32 %s18, 1
      %s24 = ssub.s32 %s18, 2
      %s31 = sadd.s32 1, %s26
      %p32 = scmp.ge.s32.totalorder %s31, 2
      %s33 = scalar_select %p32, 0, %s31
      %s34 = sadd.s32 1, %s25
      %s35 = scalar_select %p32, %s34, %s25
      %p36 = scmp.ge.s32.totalorder %s35, 2
      %s37 = scalar_select %p36, 0, %s35
      %s38 = ssub.s32 %s26, %s33
      %p39 = scmp.eq.s32.totalorder %s38, 0
      %s41 = sadd.s32 %s40, 1
      %s42 = scalar_select %p39, %s40, %s41
      %p45 = pneg %p39
      %p46 = scmp.eq.s32.totalorder %s18, 3
      %p47 = por %p45, %p46
      %p48 = scmp.ne.s32.totalorder %s40, %s43
      %p49 = scmp.eq.s32.totalorder %s18, 0
      %p50 = por %p48, %p49
      %p51 = scmp.ne.s32.totalorder %s40, %s43
      %p52 = scmp.eq.s32.totalorder %s23, 3
      %p53 = por %p51, %p52
      %p54 = scmp.ne.s32.totalorder %s43, %s44
      %p55 = scmp.eq.s32.totalorder %s23, 0
      %p56 = por %p54, %p55
      %p57 = scmp.ne.s32.totalorder %s43, %s44
      %p58 = scmp.eq.s32.totalorder %s24, 3
      %p59 = por %p57, %p58
      %p61 = scmp.ne.s32.totalorder %s44, %s60
      %p62 = scmp.eq.s32.totalorder %s24, 0
      %p63 = por %p61, %p62
      %s64 = ssub.s32 %s25, %s37
      %p65 = scmp.eq.s32.totalorder %s64, 0
      %s67 = sadd.s32 %s66, 1
      %s68 = scalar_select %p65, %s66, %s67
      %p71 = pneg %p65
      %p72 = scmp.eq.s32.totalorder %s18, 3
      %p73 = por %p71, %p72
      %p74 = scmp.ne.s32.totalorder %s66, %s69
      %p75 = scmp.eq.s32.totalorder %s18, 0
      %p76 = por %p74, %p75
      %p77 = scmp.ne.s32.totalorder %s66, %s69
      %p78 = scmp.eq.s32.totalorder %s23, 3
      %p79 = por %p77, %p78
      %p80 = scmp.ne.s32.totalorder %s69, %s70
      %p81 = scmp.eq.s32.totalorder %s23, 0
      %p82 = por %p80, %p81
      %p83 = scmp.ne.s32.totalorder %s69, %s70
      %p84 = scmp.eq.s32.totalorder %s24, 3
      %p85 = por %p83, %p84
      %p87 = scmp.ne.s32.totalorder %s70, %s86
      %p88 = scmp.eq.s32.totalorder %s24, 0
      %p89 = por %p87, %p88
      %s90 = ssub.s32 %s25, %s37
      %p91 = scmp.eq.s32.totalorder %s90, 0
      %s93 = sadd.s32 %s92, 1
      %s94 = scalar_select %p91, %s92, %s93
      %p97 = pneg %p91
      %p98 = scmp.eq.s32.totalorder %s18, 3
      %p99 = por %p97, %p98
      %p100 = scmp.ne.s32.totalorder %s92, %s95
      %p101 = scmp.eq.s32.totalorder %s18, 0
      %p102 = por %p100, %p101
      %p103 = scmp.ne.s32.totalorder %s92, %s95
      %p104 = scmp.eq.s32.totalorder %s23, 3
      %p105 = por %p103, %p104
      %p106 = scmp.ne.s32.totalorder %s95, %s96
      %p107 = scmp.eq.s32.totalorder %s23, 0
      %p108 = por %p106, %p107
      %p109 = scmp.ne.s32.totalorder %s95, %s96
      %p110 = scmp.eq.s32.totalorder %s24, 3
      %p111 = por %p109, %p110
      %p113 = scmp.ne.s32.totalorder %s96, %s112
      %p114 = scmp.eq.s32.totalorder %s24, 0
      %p115 = por %p113, %p114
      %s116 = ssub.s32 %s26, %s33
      %s117 = ssub.s32 %s25, %s37
      %s118 = sor.u32 %s116, %s117
      %p119 = scmp.eq.s32.totalorder %s118, 0
      %s121 = sadd.s32 %s120, 1
      %s122 = scalar_select %p119, %s120, %s121
      %p125 = pneg %p119
      %p126 = scmp.eq.s32.totalorder %s18, 3
      %p127 = por %p125, %p126
      %p128 = scmp.ne.s32.totalorder %s120, %s123
      %p129 = scmp.eq.s32.totalorder %s18, 0
      %p130 = por %p128, %p129
      %p131 = scmp.ne.s32.totalorder %s120, %s123
      %p132 = scmp.eq.s32.totalorder %s23, 3
      %p133 = por %p131, %p132
      %p134 = scmp.ne.s32.totalorder %s123, %s124
      %p135 = scmp.eq.s32.totalorder %s23, 0
      %p136 = por %p134, %p135
      %p137 = scmp.ne.s32.totalorder %s123, %s124
      %p138 = scmp.eq.s32.totalorder %s24, 3
      %p139 = por %p137, %p138
      %p141 = scmp.ne.s32.totalorder %s124, %s140
      %p142 = scmp.eq.s32.totalorder %s24, 0
      %p143 = por %p141, %p142
      %p144 = scmp.le.s32.totalorder 1, %s18
      %p145 = scmp.lt.s32.totalorder %s18, 5
      %p146 = pnand %p144, %p145
      %p147 = pneg %p146
      // Predicated region
      $region9: #{tpu_custom_call.1} parent=5 // pred_check
        _
      $region10: #{tpu_custom_call.1} parent=5 // pred_check_branch
        %149 = sbr.rel (%p146) target = $region12
      $region11: #{tpu_custom_call.1} parent=5 // pred_region
        %s150 = ssub.s32 %s18, 1
      $region12: #{tpu_custom_call.1} parent=5 // pred_fallthru
        _
      %p151 = scmp.lt.s32.totalorder %s18, 4
      // Predicated region
      $region13: #{tpu_custom_call.1} parent=5 // pred_check
        %p152 = pneg %p151
      $region14: #{tpu_custom_call.1} parent=5 // pred_check_branch
        %154 = sbr.rel (%p152) target = $region16
      $region15: #{tpu_custom_call.1} parent=5 // pred_region
        // Predicated region
        $region17: #{tpu_custom_call.1} parent=15 // pred_check
          %p155 = pneg %p50
        $region18: #{tpu_custom_call.1} parent=15 // pred_check_branch
          %157 = sbr.rel (%p155) target = $region20
        $region19: #{tpu_custom_call.1} parent=15 // pred_region
          %s158 = sand.u32 %s40, 1
          %s159 = scalar_lea.sflag [#allocation3], %s158
          %s160 = sand.u32 %s40, 1
          %s161 = smul.addr %s160, 4
          %s162 = scalar_lea.vmem [#allocation2], %s161
          %s164 = ssub.s32 64, 64
          %165 = vsyncadd %s159, %s164
          %s166 = smul.addr %s26, 64
          %s167 = scalar_lea.hbm %s0, %s166
          %s169 = sshll.u32 %s162, 4
          %s170 = int_to_ptr.vmem [resolvable:$true] %s169
          %172 = dma.hbm_to_vmem [thread:$0]  %s167, 64, %s170, %s159
        $region20: #{tpu_custom_call.1} parent=15 // pred_fallthru
          _
        // Predicated region
        $region21: #{tpu_custom_call.1} parent=15 // pred_check
          %p173 = pneg %p76
        $region22: #{tpu_custom_call.1} parent=15 // pred_check_branch
          %175 = sbr.rel (%p173) target = $region24
        $region23: #{tpu_custom_call.1} parent=15 // pred_region
          %s176 = smul.u32 2, %s25
          %s177 = ssub.s32 3, %s176
          %p178 = scmp.lt.s32.totalorder %s177, 2
          %s179 = scalar_select %p178, %s177, 2
          %s180 = smul.u32 16, %s179
          %p181 = scmp.lt.s32.totalorder %s176, 2
          %s182 = scalar_select %p181, %s176, 2
          %s183 = scalar_lea.vmem %s1, %s182
          %s184 = smul.u32 2, %s25
          %s185 = ssub.s32 3, %s184
          %p186 = scmp.lt.s32.totalorder %s185, 2
          %s187 = scalar_select %p186, %s185, 2
          %s188 = smul.u32 16, %s187
        $region24: #{tpu_custom_call.1} parent=15 // pred_fallthru
          _
        // Predicated region
        $region25: #{tpu_custom_call.1} parent=15 // pred_check
          %p189 = pneg %p102
        $region26: #{tpu_custom_call.1} parent=15 // pred_check_branch
          %191 = sbr.rel (%p189) target = $region28
        $region27: #{tpu_custom_call.1} parent=15 // pred_region
          %s192 = sand.u32 %s92, 1
          %s193 = scalar_lea.sflag [#allocation6], %s192
          %s194 = sand.u32 %s92, 1
          %s195 = smul.addr %s194, 8
          %s196 = scalar_lea.vmem [#allocation5], %s195
          %s197 = smul.u32 2, %s25
          %s198 = ssub.s32 3, %s197
          %p199 = scmp.lt.s32.totalorder %s198, 2
          %s200 = scalar_select %p199, %s198, 2
          %s201 = smul.u32 64, %s200
          %s203 = ssub.s32 128, %s201
          %204 = vsyncadd %s193, %s203
          %p205 = scmp.ne.s32.totalorder 0, %s201
          %s206 = smul.addr %s197, 64
          %s207 = scalar_lea.hbm %s2, %s206
          %s208 = smul.u32 4, %s200
          %s209 = sshll.u32 %s196, 4
          %s210 = int_to_ptr.vmem [resolvable:$true] %s209
          %s211 = sshll.u32 %s208, 4
          %215 = dma.hbm_to_vmem [thread:$0]  (%p205), %s207, %s211, %s210, %s193, 64, 64, 4
        $region28: #{tpu_custom_call.1} parent=15 // pred_fallthru
          _
      $region16: #{tpu_custom_call.1} parent=5 // pred_fallthru
        _
      %p216 = scmp.le.s32.totalorder 1, %s18
      %p217 = scmp.lt.s32.totalorder %s18, 5
      %p218 = pnand %p216, %p217
      %p219 = pneg %p218
      // Predicated region
      $region29: #{tpu_custom_call.1} parent=5 // pred_check
        _
      $region30: #{tpu_custom_call.1} parent=5 // pred_check_branch
        %221 = sbr.rel (%p218) target = $region32
      $region31: #{tpu_custom_call.1} parent=5 // pred_region
        %s222 = ssub.s32 %s18, 1
        %s223 = sand.u32 %s43, 1
        %s224 = scalar_lea.sflag [#allocation3], %s223
        %s225 = sand.u32 %s43, 1
        %s226 = smul.addr %s225, 4
        %s227 = scalar_lea.vmem [#allocation2], %s226
        // Predicated region
        $region33: #{tpu_custom_call.1} parent=31 // pred_check
          %p228 = pneg %p56
        $region34: #{tpu_custom_call.1} parent=31 // pred_check_branch
          %230 = sbr.rel (%p228) target = $region36
        $region35: #{tpu_custom_call.1} parent=31 // pred_region
          %231 = dma.done %s224, 64
        $region36: #{tpu_custom_call.1} parent=31 // pred_fallthru
          _
        %s232 = sand.u32 %s95, 1
        %s233 = scalar_lea.sflag [#allocation6], %s232
        %s234 = sand.u32 %s95, 1
        %s235 = smul.addr %s234, 8
        %s236 = scalar_lea.vmem [#allocation5], %s235
        // Predicated region
        $region37: #{tpu_custom_call.1} parent=31 // pred_check
          %p237 = pneg %p108
        $region38: #{tpu_custom_call.1} parent=31 // pred_check_branch
          %239 = sbr.rel (%p237) target = $region40
        $region39: #{tpu_custom_call.1} parent=31 // pred_region
          %240 = dma.done %s233, 128
        $region40: #{tpu_custom_call.1} parent=31 // pred_fallthru
          _
        %s241 = sand.u32 %s43, 1
        %s242 = scalar_lea.sflag [#allocation3], %s241
        %s243 = sand.u32 %s43, 1
        %s244 = smul.addr %s243, 4
        %s245 = scalar_lea.vmem [#allocation2], %s244
        %p246 = pneg %p56
        %p247 = pneg %p53
        %s248 = smul.u32 2, %s27
        %s249 = ssub.s32 3, %s248
        %p250 = scmp.lt.s32.totalorder %s249, 2
        %s251 = scalar_select %p250, %s249, 2
        %s252 = smul.u32 16, %s251
        %p253 = scmp.lt.s32.totalorder %s248, 2
        %s254 = scalar_select %p253, %s248, 2
        %s255 = scalar_lea.vmem %s1, %s254
        %p256 = pneg %p82
        %p257 = pneg %p79
        %s258 = sand.u32 %s95, 1
        %s259 = scalar_lea.sflag [#allocation6], %s258
        %s260 = sand.u32 %s95, 1
        %s261 = smul.addr %s260, 8
        %s262 = scalar_lea.vmem [#allocation5], %s261
        %p263 = pneg %p108
        %p264 = pneg %p105
        %p265 = pneg %p136
        %p266 = pneg %p133
        %s267 = sand.u32 %s123, 1
        %s268 = scalar_lea.sflag [#allocation4], %s267
        %s269 = sand.u32 %s123, 1
        %s270 = smul.addr %s269, 16
        %s271 = scalar_lea.vmem [#allocation7], %s270
        %s272 = smul.u32 2, %s27
        %s273 = ssub.s32 3, %s272
        %p274 = scmp.lt.s32.totalorder %s273, 2
        %s275 = scalar_select %p274, %s273, 2
        %s276 = smul.u32 16, %s275
        %p277 = scmp.lt.s32.totalorder %s272, 2
        %s278 = scalar_select %p277, %s272, 2
        %s279 = scalar_lea.vmem %s1, %s278
        %s280 = smul.u32 2, %s27
        %s281 = ssub.s32 3, %s280
        %p282 = scmp.lt.s32.totalorder %s281, 2
        %s283 = scalar_select %p282, %s281, 2
        %s284 = smul.u32 16, %s283
        %s285 = smul.u32 2, %s27
        %s286 = ssub.s32 3, %s285
        %p287 = scmp.lt.s32.totalorder %s286, 2
        %s288 = scalar_select %p287, %s286, 2
        %s289 = smul.u32 64, %s288
        %s290 = smul.u32 2, %s27
        %s291 = ssub.s32 3, %s290
        %p292 = scmp.lt.s32.totalorder %s291, 2
        %s293 = scalar_select %p292, %s291, 2
        %s294 = smul.u32 128, %s293
        %v295 = vld [vmem:[%s227] sm:$0xf]
        %v296 = vld [vmem:[%s279] sm:$0x1]
        %v297 = vld [vmem:[%s279 + $0x1] sm:$0x1]
        %v298 = vld [vmem:[%s236] sm:$0x7]
        %v299 = vld [vmem:[%s236 + $0x4] sm:$0x7]
        %v301 = vrot.slane %v295, 7
        %v305 = vrot.slane %v298, 3
        %v306 = vrot.slane %v299, 3
        %vm309 = vcmask 1040384
        %v310 = vsel %vm309, %v296, %v301
        %v311 = vsel %vm309, %v297, %v301
        %vm312 = vcmask 1044480
        %v313 = vsel %vm312, %v310, %v305
        %v314 = vsel %vm312, %v311, %v306
        %vm315 = vcmask 261120
        %316 = vst.msk [vmem:[%s271] sm:$0xff] %vm315, %v313
        %317 = vst.msk [vmem:[%s271 + $0x8] sm:$0xff] %vm315, %v314
        %s318 = sand.u32 %s123, 1
        %s319 = scalar_lea.sflag [#allocation4], %s318
        %s320 = sand.u32 %s123, 1
        %s321 = smul.addr %s320, 16
        %s322 = scalar_lea.vmem [#allocation7], %s321
        // Predicated region
        $region41: #{tpu_custom_call.1} parent=31 // pred_check
          %p323 = pneg %p133
        $region42: #{tpu_custom_call.1} parent=31 // pred_check_branch
          %325 = sbr.rel (%p323) target = $region44
        $region43: #{tpu_custom_call.1} parent=31 // pred_region
          %s326 = smul.u32 2, %s27
          %s327 = ssub.s32 3, %s326
          %p328 = scmp.lt.s32.totalorder %s327, 2
          %s329 = scalar_select %p328, %s327, 2
          %s330 = smul.u32 128, %s329
          %s332 = ssub.s32 256, %s330
          %333 = vsyncadd %s319, %s332
          %p334 = scmp.ne.s32.totalorder 0, %s330
          %s335 = smul.addr %s28, 3
          %s336 = sadd.s32 %s326, %s335
          %s337 = smul.addr %s336, 128
          %s338 = scalar_lea.hbm %s3, %s337
          %s339 = smul.u32 8, %s329
          %s340 = sshll.u32 %s322, 4
          %s341 = int_to_ptr.vmem [resolvable:$true] %s340
          %s342 = sshll.u32 %s339, 4
          %346 = dma.vmem_to_hbm [thread:$0]  (%p334), %s341, %s342, %s338, %s319, 128, 128, 8
        $region44: #{tpu_custom_call.1} parent=31 // pred_fallthru
          _
      $region32: #{tpu_custom_call.1} parent=5 // pred_fallthru
        _
      %p347 = scmp.le.s32.totalorder 2, %s18
      // Predicated region
      $region45: #{tpu_custom_call.1} parent=5 // pred_check
        %p348 = pneg %p347
      $region46: #{tpu_custom_call.1} parent=5 // pred_check_branch
        %350 = sbr.rel (%p348) target = $region48
      $region47: #{tpu_custom_call.1} parent=5 // pred_region
        %s351 = ssub.s32 %s18, 2
        // Predicated region
        $region49: #{tpu_custom_call.1} parent=47 // pred_check
          %p352 = pneg %p139
        $region50: #{tpu_custom_call.1} parent=47 // pred_check_branch
          %354 = sbr.rel (%p352) target = $region52
        $region51: #{tpu_custom_call.1} parent=47 // pred_region
          %s355 = sand.u32 %s124, 1
          %s356 = scalar_lea.sflag [#allocation4], %s355
          %s357 = sand.u32 %s124, 1
          %s358 = smul.addr %s357, 16
          %s359 = scalar_lea.vmem [#allocation7], %s358
          %360 = dma.done %s356, 256
        $region52: #{tpu_custom_call.1} parent=47 // pred_fallthru
          _
      $region48: #{tpu_custom_call.1} parent=5 // pred_fallthru
        _
    $region6: #{tpu_custom_call.1} parent=1 // loop_footer
      %s22 = sadd.s32 1, %s18
    $region7: #{tpu_custom_call.1} parent=1 // loop_footer_branch
      %17 = sbr.rel target = $region3
    $region8: #{tpu_custom_call.1} parent=1 // loop_exit
      _
    %361 = vsyncpa [#allocation3], 1
    %s362 = scalar_lea.sflag [#allocation3], 1
    %363 = vsyncpa %s362, 1
    %364 = vsyncpa [#allocation6], 1
    %s365 = scalar_lea.sflag [#allocation6], 1
    %366 = vsyncpa %s365, 1
    %367 = vsyncpa [#allocation4], 1
    %s368 = scalar_lea.sflag [#allocation4], 1
    %369 = vsyncpa %s368, 1

</llo_original>
